<compile_context>
chip_gen: v6e
topology: v6e:2x2x1
jax: 0.10.0
libtpu: 0.0.40
codegen_flags: <defaults>
</compile_context>

<pallas_src>
import functools

import jax
import jax.numpy as jnp
import numpy as np
from jax import lax
from jax.experimental import pallas as pl
from jax.experimental.pallas import tpu as pltpu


def _round_up(x, m):
    return (x + m - 1) // m * m


def _deconvs_kernel(x_ref, w_ref, o_ref, xf_ref, patches_ref, *,
                    H, W, K, Cin, Cin_pad, B_tile):
    """One grid step: B_tile NCHW images -> one im2col MXU matmul.

    x_ref       : (B_tile, Cin, H*W)              bf16, spatial flattened on lanes
    w_ref       : (Cout_pad, K*K*Cin_pad)         bf16, packed + concatenated block weights
    o_ref       : (B_tile, Cout_pad, H*W)         f32
    xf_ref      : (B_tile*Cin_pad, pwl+HW+pwr)    bf16 scratch, flat zero-padded images
    patches_ref : (K*K*Cin_pad, B_tile*H*W)       bf16 scratch, im2col patch matrix
    """
    HW = H * W
    pad = K // 2
    pwr = pad * (W + 1)            # max |flat shift| of any tap
    pwl = _round_up(pwr, 128)      # left pad rounded up -> lane-aligned interior write

    # Fused 'SAME' padding: zero only the pad lanes and the padded-channel rows;
    # the real interior rows are fully overwritten below (no full-scratch zero fill).
    xf_ref[:, :pwl] = jnp.zeros((B_tile * Cin_pad, pwl), xf_ref.dtype)
    xf_ref[:, pwl + HW:] = jnp.zeros((B_tile * Cin_pad, pwr), xf_ref.dtype)
    for b in range(B_tile):
        r0 = b * Cin_pad
        xf_ref[r0:r0 + Cin, pwl:pwl + HW] = x_ref[b]
        if Cin_pad != Cin:
            xf_ref[r0 + Cin:r0 + Cin_pad, pwl:pwl + HW] = jnp.zeros(
                (Cin_pad - Cin, HW), xf_ref.dtype)

    # A flat shift d = dh*W + dw reads the correct neighbour except where the column
    # wraps to an adjacent row; mask those.  Row over/underflow lands in the zero
    # pads.  The centre column (kw == pad) is always valid -> no select emitted.
    w_idx = lax.broadcasted_iota(jnp.int32, (Cin_pad, HW), 1) % W
    col_ok = {kw: (w_idx + (kw - pad) >= 0) & (w_idx + (kw - pad) < W)
              for kw in range(K) if kw != pad}
    zeros_patch = jnp.zeros((Cin_pad, HW), xf_ref.dtype)

    # im2col: each tap is a static lane-shifted window of the padded image, stored
    # straight into an 8-sublane-aligned row block of the patches scratch.
    for b in range(B_tile):
        r0 = b * Cin_pad
        c0 = b * HW
        for kh in range(K):
            for kw in range(K):
                t = kh * K + kw
                d = (kh - pad) * W + (kw - pad)
                patch = xf_ref[r0:r0 + Cin_pad, pwl + d:pwl + d + HW]
                if kw != pad:
                    patch = jnp.where(col_ok[kw], patch, zeros_patch)
                patches_ref[t * Cin_pad:(t + 1) * Cin_pad, c0:c0 + HW] = patch

    # Single MXU matmul, bf16 operands, f32 accumulation.
    acc = jnp.dot(w_ref[...], patches_ref[...],
                  preferred_element_type=jnp.float32)        # (Cout_pad, B_tile*HW)
    for b in range(B_tile):
        o_ref[b] = acc[:, b * HW:(b + 1) * HW].astype(o_ref.dtype)


def _choose_batch_tile(N, Cin, Cin_pad, Cout_pad, HW, K, pwl, pwr, vmem_budget):
    """Largest divisor of N whose per-step VMEM estimate fits the budget."""
    def est(bt):
        xf = bt * Cin_pad * (pwl + HW + pwr) * 2                 # bf16 padded images
        patches = K * K * Cin_pad * bt * HW * 2                  # bf16 patch matrix
        x_blk = 2 * bt * Cin * HW * 2                            # double-buffered input
        w_blk = 2 * Cout_pad * K * K * Cin_pad * 2               # (resident) weights
        o_blk = 2 * bt * Cout_pad * HW * 4                       # double-buffered output
        return xf + patches + x_blk + w_blk + o_blk

    bt = N
    while bt > 1 and (N % bt != 0 or est(bt) > vmem_budget):
        bt -= 1
    return bt, est(bt)


@functools.partial(jax.jit, static_argnames=("kernel_size", "out_channels"))
def deconvs_forward(x_nchw, w_packed, *, kernel_size, out_channels):
    """x_nchw: (N, Cin, H, W) f32; w_packed: (Cout_pad, K*K*Cin_pad) bf16."""
    N, Cin, H, W = x_nchw.shape
    K = kernel_size
    assert K % 2 == 1, "same-padding conv assumes odd kernel size"
    HW = H * W
    Cin_pad = _round_up(Cin, 8)
    KKC_pad = K * K * Cin_pad
    Cout_pad = w_packed.shape[0]
    assert w_packed.shape == (Cout_pad, KKC_pad)
    pad = K // 2
    pwr = pad * (W + 1)
    pwl = _round_up(pwr, 128)

    # Fold several images per grid step (amortize per-step overhead at small HW).
    B_tile, est_bytes = _choose_batch_tile(
        N, Cin, Cin_pad, Cout_pad, HW, K, pwl, pwr, vmem_budget=24 << 20)
    grid = (N // B_tile,)

    # NCHW-native: flattening spatial is a free view; bf16 cast halves HBM bytes.
    x_flat = x_nchw.reshape(N, Cin, HW).astype(jnp.bfloat16)

    vmem_limit = int(min(64 << 20, max(32 << 20, 2 * est_bytes)))

    out_flat = pl.pallas_call(
        functools.partial(_deconvs_kernel, H=H, W=W, K=K, Cin=Cin,
                          Cin_pad=Cin_pad, B_tile=B_tile),
        out_shape=jax.ShapeDtypeStruct((N, Cout_pad, HW), x_nchw.dtype),
        grid_spec=pltpu.PrefetchScalarGridSpec(
            num_scalar_prefetch=0,
            grid=grid,
            in_specs=[
                pl.BlockSpec((B_tile, Cin, HW), lambda n: (n, 0, 0)),
                pl.BlockSpec((Cout_pad, KKC_pad), lambda n: (0, 0)),
            ],
            out_specs=pl.BlockSpec((B_tile, Cout_pad, HW), lambda n: (n, 0, 0)),
            scratch_shapes=[
                pltpu.VMEM((B_tile * Cin_pad, pwl + HW + pwr), jnp.bfloat16),
                pltpu.VMEM((KKC_pad, B_tile * HW), jnp.bfloat16),
            ],
        ),
        compiler_params=pltpu.CompilerParams(
            dimension_semantics=("parallel",),
            vmem_limit_bytes=vmem_limit),
    )(x_flat, w_packed)

    return out_flat[:, :out_channels, :].reshape(N, out_channels, H, W)


class Deconvs:
    """JAX/Pallas port of modelbuild/deconver.py::Deconvs (forward pass)."""

    def __init__(self, admms_args, key):
        self.kernel_size = admms_args[0]["kernel_size"]
        self.in_channels = admms_args[0]["in_channels"]
        K, Cin = self.kernel_size, self.in_channels
        weights = []
        for i, args in enumerate(admms_args):
            assert args["kernel_size"] == K, \
                "all blocks assumed to share one kernel size for a single fused matmul"
            assert args["in_channels"] == Cin
            k = jax.random.fold_in(key, i)
            # deterministic synthetic init, (K, K, Cin, Cout_i)
            w = jax.random.normal(
                k, (K, K, Cin, args["out_channels"]), dtype=jnp.float32,
            ) * (1.0 / np.sqrt(Cin * K ** 2))
            weights.append(w)
        # torch.cat(..., dim=1) over block outputs == concat block weights on C_out.
        self.w_f32 = jnp.concatenate(weights, axis=-1)        # (K, K, Cin, Cout)
        self.out_channels = int(self.w_f32.shape[-1])

        # Pack weights ONCE (hoisted out of the forward path):
        # (K,K,Cin,Cout) -> bf16 (Cout_pad, K*K*Cin_pad), row order matching the
        # in-kernel (kh, kw, ci) patch row order; padded channels/Cout rows are zero.
        Cin_pad = _round_up(Cin, 8)
        Cout = self.out_channels
        Cout_pad = _round_up(Cout, 8)
        w = jnp.pad(self.w_f32, ((0, 0), (0, 0), (0, Cin_pad - Cin), (0, 0)))
        w2d = jnp.transpose(w.reshape(K * K * Cin_pad, Cout))   # (Cout, K*K*Cin_pad)
        if Cout_pad != Cout:
            w2d = jnp.pad(w2d, ((0, Cout_pad - Cout), (0, 0)))
        self.w_packed = w2d.astype(jnp.bfloat16)

    def __call__(self, x_nchw):
        return deconvs_forward(x_nchw, self.w_packed,
                               kernel_size=self.kernel_size,
                               out_channels=self.out_channels)


def _reference(x_nchw, w_kkio):
    # pure-JAX reference (cross-correlation, 'SAME' padding), NCHW in/out.
    # Operands are rounded to bf16 to match the kernel's bf16-operand / f32-accum math.
    xb = x_nchw.astype(jnp.bfloat16).astype(jnp.float32)
    wb = w_kkio.astype(jnp.bfloat16).astype(jnp.float32)
    w_oihw = jnp.transpose(wb, (3, 2, 0, 1))
    return jax.lax.conv_general_dilated(
        xb, w_oihw, window_strides=(1, 1), padding="SAME",
        dimension_numbers=("NCHW", "OIHW", "NCHW"))


if __name__ == "__main__":
    key = jax.random.PRNGKey(0)
    xkey, wkey = jax.random.split(key)

    N, Cin, H, W = 2, 4, 16, 16
    admms_args = [
        {"in_channels": Cin, "out_channels": 4, "kernel_size": 3},
        {"in_channels": Cin, "out_channels": 4, "kernel_size": 3},
        {"in_channels": Cin, "out_channels": 8, "kernel_size": 3},
    ]

    x = jax.random.normal(xkey, (N, Cin, H, W), dtype=jnp.float32)

    model = Deconvs(admms_args, wkey)
    out = jax.block_until_ready(model(x))

    ref = jax.block_until_ready(_reference(x, model.w_f32))
    np.testing.assert_allclose(np.asarray(out), np.asarray(ref),
                               rtol=1e-3, atol=1e-3)
    assert out.shape == (N, 4 + 4 + 8, H, W)

    print("KERNEL_OK")
</pallas_src>

<mosaic_0001>
module attributes {stable_mosaic.version = 11 : i64} {
  func.func @_deconvs_kernel(%arg0: i32, %arg1: memref<2x4x256xbf16, #tpu.memory_space<vmem>>, %arg2: memref<16x72xbf16, #tpu.memory_space<vmem>>, %arg3: memref<2x16x256xf32, #tpu.memory_space<vmem>>, %arg4: memref<16x401xbf16, #tpu.memory_space<vmem>>, %arg5: memref<72x512xbf16, #tpu.memory_space<vmem>>) attributes {dimension_semantics = [#tpu.dimension_semantics<parallel>], iteration_bounds = array<i64: 1>, scalar_prefetch = 0 : i64, scratch_operands = 2 : i64, tpu.core_type = #tpu.core_type<tc>, window_params = [{transform_indices = @transform_0, window_bounds = array<i64: 2, 4, 256>}, {pipeline_mode = #tpu.pipeline_mode<synchronous>, transform_indices = @transform_1, window_bounds = array<i64: 16, 72>}, {transform_indices = @transform_2, window_bounds = array<i64: 2, 16, 256>}]} {
    %cst = arith.constant 0.000000e+00 : bf16
    %0 = vector.broadcast %cst : bf16 to vector<16x128xbf16>
    %c0 = arith.constant 0 : index
    %c0_0 = arith.constant 0 : index
    %1 = vector.load %arg4[%c0, %c0_0] : memref<16x401xbf16, #tpu.memory_space<vmem>>, vector<16x128xbf16>
    tpu.vector_store %arg4[%c0, %c0_0], %0 {strides = array<i32>} : memref<16x401xbf16, #tpu.memory_space<vmem>>, vector<16x128xbf16>,
    %cst_1 = arith.constant 0.000000e+00 : bf16
    %2 = vector.broadcast %cst_1 : bf16 to vector<16x17xbf16>
    %c0_2 = arith.constant 0 : index
    %c384 = arith.constant 384 : index
    %3 = vector.load %arg4[%c0_2, %c384] : memref<16x401xbf16, #tpu.memory_space<vmem>>, vector<16x17xbf16>
    tpu.vector_store %arg4[%c0_2, %c384], %2 {strides = array<i32>} : memref<16x401xbf16, #tpu.memory_space<vmem>>, vector<16x17xbf16>,
    %c0_3 = arith.constant 0 : index
    %c0_4 = arith.constant 0 : index
    %c0_5 = arith.constant 0 : index
    %4 = vector.load %arg1[%c0_3, %c0_4, %c0_5] : memref<2x4x256xbf16, #tpu.memory_space<vmem>>, vector<1x4x256xbf16>
    %5 = vector.shape_cast %4 : vector<1x4x256xbf16> to vector<4x256xbf16>
    %c0_6 = arith.constant 0 : index
    %c128 = arith.constant 128 : index
    %6 = vector.load %arg4[%c0_6, %c128] : memref<16x401xbf16, #tpu.memory_space<vmem>>, vector<4x256xbf16>
    tpu.vector_store %arg4[%c0_6, %c128], %5 {strides = array<i32>} : memref<16x401xbf16, #tpu.memory_space<vmem>>, vector<4x256xbf16>,
    %cst_7 = arith.constant 0.000000e+00 : bf16
    %7 = vector.broadcast %cst_7 : bf16 to vector<4x256xbf16>
    %c4 = arith.constant 4 : index
    %c128_8 = arith.constant 128 : index
    %8 = vector.load %arg4[%c4, %c128_8] : memref<16x401xbf16, #tpu.memory_space<vmem>>, vector<4x256xbf16>
    tpu.vector_store %arg4[%c4, %c128_8], %7 {strides = array<i32>} : memref<16x401xbf16, #tpu.memory_space<vmem>>, vector<4x256xbf16>,
    %c1 = arith.constant 1 : index
    %c0_9 = arith.constant 0 : index
    %c0_10 = arith.constant 0 : index
    %9 = vector.load %arg1[%c1, %c0_9, %c0_10] : memref<2x4x256xbf16, #tpu.memory_space<vmem>>, vector<1x4x256xbf16>
    %10 = vector.shape_cast %9 : vector<1x4x256xbf16> to vector<4x256xbf16>
    %c8 = arith.constant 8 : index
    %c128_11 = arith.constant 128 : index
    %11 = vector.load %arg4[%c8, %c128_11] : memref<16x401xbf16, #tpu.memory_space<vmem>>, vector<4x256xbf16>
    tpu.vector_store %arg4[%c8, %c128_11], %10 {strides = array<i32>} : memref<16x401xbf16, #tpu.memory_space<vmem>>, vector<4x256xbf16>,
    %cst_12 = arith.constant 0.000000e+00 : bf16
    %12 = vector.broadcast %cst_12 : bf16 to vector<4x256xbf16>
    %c12 = arith.constant 12 : index
    %c128_13 = arith.constant 128 : index
    %13 = vector.load %arg4[%c12, %c128_13] : memref<16x401xbf16, #tpu.memory_space<vmem>>, vector<4x256xbf16>
    tpu.vector_store %arg4[%c12, %c128_13], %12 {strides = array<i32>} : memref<16x401xbf16, #tpu.memory_space<vmem>>, vector<4x256xbf16>,
    %14 = tpu.iota {dimensions = array<i32: 1>} : vector<8x256xi32>
    %c16_i32 = arith.constant 16 : i32
    %c0_i32 = arith.constant 0 : i32
    %15 = arith.cmpi eq, %c16_i32, %c0_i32 : i32
    %c1_i32 = arith.constant 1 : i32
    %16 = arith.select %15, %c1_i32, %c16_i32 : i32
    %17 = vector.broadcast %16 : i32 to vector<8x256xi32>
    %18 = arith.remsi %14, %17 : vector<8x256xi32>
    %c0_i32_14 = arith.constant 0 : i32
    %19 = vector.broadcast %c0_i32_14 : i32 to vector<8x256xi32>
    %20 = arith.cmpi ne, %18, %19 : vector<8x256xi32>
    %c0_i32_15 = arith.constant 0 : i32
    %21 = vector.broadcast %c0_i32_15 : i32 to vector<8x256xi32>
    %22 = arith.cmpi slt, %18, %21 : vector<8x256xi32>
    %c0_i32_16 = arith.constant 0 : i32
    %23 = arith.cmpi slt, %16, %c0_i32_16 : i32
    %24 = vector.broadcast %23 : i1 to vector<8x256xi1>
    %25 = vector.broadcast %24 : vector<8x256xi1> to vector<8x256xi1>
    %26 = arith.xori %22, %25 : vector<8x256xi1>
    %27 = arith.andi %26, %20 : vector<8x256xi1>
    %28 = vector.broadcast %16 : i32 to vector<8x256xi32>
    %29 = arith.addi %18, %28 : vector<8x256xi32>
    %30 = arith.select %27, %29, %18 : vector<8x256xi1>, vector<8x256xi32>
    %c-1_i32 = arith.constant -1 : i32
    %31 = vector.broadcast %c-1_i32 : i32 to vector<8x256xi32>
    %32 = arith.addi %30, %31 : vector<8x256xi32>
    %c0_i32_17 = arith.constant 0 : i32
    %33 = vector.broadcast %c0_i32_17 : i32 to vector<8x256xi32>
    %34 = arith.cmpi sge, %32, %33 : vector<8x256xi32>
    %c-1_i32_18 = arith.constant -1 : i32
    %35 = vector.broadcast %c-1_i32_18 : i32 to vector<8x256xi32>
    %36 = arith.addi %30, %35 : vector<8x256xi32>
    %c16_i32_19 = arith.constant 16 : i32
    %37 = vector.broadcast %c16_i32_19 : i32 to vector<8x256xi32>
    %38 = arith.cmpi slt, %36, %37 : vector<8x256xi32>
    %39 = arith.andi %34, %38 : vector<8x256xi1>
    %c1_i32_20 = arith.constant 1 : i32
    %40 = vector.broadcast %c1_i32_20 : i32 to vector<8x256xi32>
    %41 = arith.addi %30, %40 : vector<8x256xi32>
    %c0_i32_21 = arith.constant 0 : i32
    %42 = vector.broadcast %c0_i32_21 : i32 to vector<8x256xi32>
    %43 = arith.cmpi sge, %41, %42 : vector<8x256xi32>
    %c1_i32_22 = arith.constant 1 : i32
    %44 = vector.broadcast %c1_i32_22 : i32 to vector<8x256xi32>
    %45 = arith.addi %30, %44 : vector<8x256xi32>
    %c16_i32_23 = arith.constant 16 : i32
    %46 = vector.broadcast %c16_i32_23 : i32 to vector<8x256xi32>
    %47 = arith.cmpi slt, %45, %46 : vector<8x256xi32>
    %48 = arith.andi %43, %47 : vector<8x256xi1>
    %cst_24 = arith.constant 0.000000e+00 : bf16
    %49 = vector.broadcast %cst_24 : bf16 to vector<8x256xbf16>
    %c0_25 = arith.constant 0 : index
    %c111 = arith.constant 111 : index
    %50 = vector.load %arg4[%c0_25, %c111] : memref<16x401xbf16, #tpu.memory_space<vmem>>, vector<8x256xbf16>
    %51 = arith.select %39, %50, %49 : vector<8x256xi1>, vector<8x256xbf16>
    %c0_26 = arith.constant 0 : index
    %c0_27 = arith.constant 0 : index
    %52 = vector.load %arg5[%c0_26, %c0_27] : memref<72x512xbf16, #tpu.memory_space<vmem>>, vector<8x256xbf16>
    tpu.vector_store %arg5[%c0_26, %c0_27], %51 {strides = array<i32>} : memref<72x512xbf16, #tpu.memory_space<vmem>>, vector<8x256xbf16>,
    %c0_28 = arith.constant 0 : index
    %c112 = arith.constant 112 : index
    %53 = vector.load %arg4[%c0_28, %c112] : memref<16x401xbf16, #tpu.memory_space<vmem>>, vector<8x256xbf16>
    %c8_29 = arith.constant 8 : index
    %c0_30 = arith.constant 0 : index
    %54 = vector.load %arg5[%c8_29, %c0_30] : memref<72x512xbf16, #tpu.memory_space<vmem>>, vector<8x256xbf16>
    tpu.vector_store %arg5[%c8_29, %c0_30], %53 {strides = array<i32>} : memref<72x512xbf16, #tpu.memory_space<vmem>>, vector<8x256xbf16>,
    %c0_31 = arith.constant 0 : index
    %c113 = arith.constant 113 : index
    %55 = vector.load %arg4[%c0_31, %c113] : memref<16x401xbf16, #tpu.memory_space<vmem>>, vector<8x256xbf16>
    %56 = arith.select %48, %55, %49 : vector<8x256xi1>, vector<8x256xbf16>
    %c16 = arith.constant 16 : index
    %c0_32 = arith.constant 0 : index
    %57 = vector.load %arg5[%c16, %c0_32] : memref<72x512xbf16, #tpu.memory_space<vmem>>, vector<8x256xbf16>
    tpu.vector_store %arg5[%c16, %c0_32], %56 {strides = array<i32>} : memref<72x512xbf16, #tpu.memory_space<vmem>>, vector<8x256xbf16>,
    %c0_33 = arith.constant 0 : index
    %c127 = arith.constant 127 : index
    %58 = vector.load %arg4[%c0_33, %c127] : memref<16x401xbf16, #tpu.memory_space<vmem>>, vector<8x256xbf16>
    %59 = arith.select %39, %58, %49 : vector<8x256xi1>, vector<8x256xbf16>
    %c24 = arith.constant 24 : index
    %c0_34 = arith.constant 0 : index
    %60 = vector.load %arg5[%c24, %c0_34] : memref<72x512xbf16, #tpu.memory_space<vmem>>, vector<8x256xbf16>
    tpu.vector_store %arg5[%c24, %c0_34], %59 {strides = array<i32>} : memref<72x512xbf16, #tpu.memory_space<vmem>>, vector<8x256xbf16>,
    %c0_35 = arith.constant 0 : index
    %c128_36 = arith.constant 128 : index
    %61 = vector.load %arg4[%c0_35, %c128_36] : memref<16x401xbf16, #tpu.memory_space<vmem>>, vector<8x256xbf16>
    %c32 = arith.constant 32 : index
    %c0_37 = arith.constant 0 : index
    %62 = vector.load %arg5[%c32, %c0_37] : memref<72x512xbf16, #tpu.memory_space<vmem>>, vector<8x256xbf16>
    tpu.vector_store %arg5[%c32, %c0_37], %61 {strides = array<i32>} : memref<72x512xbf16, #tpu.memory_space<vmem>>, vector<8x256xbf16>,
    %c0_38 = arith.constant 0 : index
    %c129 = arith.constant 129 : index
    %63 = vector.load %arg4[%c0_38, %c129] : memref<16x401xbf16, #tpu.memory_space<vmem>>, vector<8x256xbf16>
    %64 = arith.select %48, %63, %49 : vector<8x256xi1>, vector<8x256xbf16>
    %c40 = arith.constant 40 : index
    %c0_39 = arith.constant 0 : index
    %65 = vector.load %arg5[%c40, %c0_39] : memref<72x512xbf16, #tpu.memory_space<vmem>>, vector<8x256xbf16>
    tpu.vector_store %arg5[%c40, %c0_39], %64 {strides = array<i32>} : memref<72x512xbf16, #tpu.memory_space<vmem>>, vector<8x256xbf16>,
    %c0_40 = arith.constant 0 : index
    %c143 = arith.constant 143 : index
    %66 = vector.load %arg4[%c0_40, %c143] : memref<16x401xbf16, #tpu.memory_space<vmem>>, vector<8x256xbf16>
    %67 = arith.select %39, %66, %49 : vector<8x256xi1>, vector<8x256xbf16>
    %c48 = arith.constant 48 : index
    %c0_41 = arith.constant 0 : index
    %68 = vector.load %arg5[%c48, %c0_41] : memref<72x512xbf16, #tpu.memory_space<vmem>>, vector<8x256xbf16>
    tpu.vector_store %arg5[%c48, %c0_41], %67 {strides = array<i32>} : memref<72x512xbf16, #tpu.memory_space<vmem>>, vector<8x256xbf16>,
    %c0_42 = arith.constant 0 : index
    %c144 = arith.constant 144 : index
    %69 = vector.load %arg4[%c0_42, %c144] : memref<16x401xbf16, #tpu.memory_space<vmem>>, vector<8x256xbf16>
    %c56 = arith.constant 56 : index
    %c0_43 = arith.constant 0 : index
    %70 = vector.load %arg5[%c56, %c0_43] : memref<72x512xbf16, #tpu.memory_space<vmem>>, vector<8x256xbf16>
    tpu.vector_store %arg5[%c56, %c0_43], %69 {strides = array<i32>} : memref<72x512xbf16, #tpu.memory_space<vmem>>, vector<8x256xbf16>,
    %c0_44 = arith.constant 0 : index
    %c145 = arith.constant 145 : index
    %71 = vector.load %arg4[%c0_44, %c145] : memref<16x401xbf16, #tpu.memory_space<vmem>>, vector<8x256xbf16>
    %72 = arith.select %48, %71, %49 : vector<8x256xi1>, vector<8x256xbf16>
    %c64 = arith.constant 64 : index
    %c0_45 = arith.constant 0 : index
    %73 = vector.load %arg5[%c64, %c0_45] : memref<72x512xbf16, #tpu.memory_space<vmem>>, vector<8x256xbf16>
    tpu.vector_store %arg5[%c64, %c0_45], %72 {strides = array<i32>} : memref<72x512xbf16, #tpu.memory_space<vmem>>, vector<8x256xbf16>,
    %c8_46 = arith.constant 8 : index
    %c111_47 = arith.constant 111 : index
    %74 = vector.load %arg4[%c8_46, %c111_47] : memref<16x401xbf16, #tpu.memory_space<vmem>>, vector<8x256xbf16>
    %75 = arith.select %39, %74, %49 : vector<8x256xi1>, vector<8x256xbf16>
    %c0_48 = arith.constant 0 : index
    %c256 = arith.constant 256 : index
    %76 = vector.load %arg5[%c0_48, %c256] : memref<72x512xbf16, #tpu.memory_space<vmem>>, vector<8x256xbf16>
    tpu.vector_store %arg5[%c0_48, %c256], %75 {strides = array<i32>} : memref<72x512xbf16, #tpu.memory_space<vmem>>, vector<8x256xbf16>,
    %c8_49 = arith.constant 8 : index
    %c112_50 = arith.constant 112 : index
    %77 = vector.load %arg4[%c8_49, %c112_50] : memref<16x401xbf16, #tpu.memory_space<vmem>>, vector<8x256xbf16>
    %c8_51 = arith.constant 8 : index
    %c256_52 = arith.constant 256 : index
    %78 = vector.load %arg5[%c8_51, %c256_52] : memref<72x512xbf16, #tpu.memory_space<vmem>>, vector<8x256xbf16>
    tpu.vector_store %arg5[%c8_51, %c256_52], %77 {strides = array<i32>} : memref<72x512xbf16, #tpu.memory_space<vmem>>, vector<8x256xbf16>,
    %c8_53 = arith.constant 8 : index
    %c113_54 = arith.constant 113 : index
    %79 = vector.load %arg4[%c8_53, %c113_54] : memref<16x401xbf16, #tpu.memory_space<vmem>>, vector<8x256xbf16>
    %80 = arith.select %48, %79, %49 : vector<8x256xi1>, vector<8x256xbf16>
    %c16_55 = arith.constant 16 : index
    %c256_56 = arith.constant 256 : index
    %81 = vector.load %arg5[%c16_55, %c256_56] : memref<72x512xbf16, #tpu.memory_space<vmem>>, vector<8x256xbf16>
    tpu.vector_store %arg5[%c16_55, %c256_56], %80 {strides = array<i32>} : memref<72x512xbf16, #tpu.memory_space<vmem>>, vector<8x256xbf16>,
    %c8_57 = arith.constant 8 : index
    %c127_58 = arith.constant 127 : index
    %82 = vector.load %arg4[%c8_57, %c127_58] : memref<16x401xbf16, #tpu.memory_space<vmem>>, vector<8x256xbf16>
    %83 = arith.select %39, %82, %49 : vector<8x256xi1>, vector<8x256xbf16>
    %c24_59 = arith.constant 24 : index
    %c256_60 = arith.constant 256 : index
    %84 = vector.load %arg5[%c24_59, %c256_60] : memref<72x512xbf16, #tpu.memory_space<vmem>>, vector<8x256xbf16>
    tpu.vector_store %arg5[%c24_59, %c256_60], %83 {strides = array<i32>} : memref<72x512xbf16, #tpu.memory_space<vmem>>, vector<8x256xbf16>,
    %c8_61 = arith.constant 8 : index
    %c128_62 = arith.constant 128 : index
    %85 = vector.load %arg4[%c8_61, %c128_62] : memref<16x401xbf16, #tpu.memory_space<vmem>>, vector<8x256xbf16>
    %c32_63 = arith.constant 32 : index
    %c256_64 = arith.constant 256 : index
    %86 = vector.load %arg5[%c32_63, %c256_64] : memref<72x512xbf16, #tpu.memory_space<vmem>>, vector<8x256xbf16>
    tpu.vector_store %arg5[%c32_63, %c256_64], %85 {strides = array<i32>} : memref<72x512xbf16, #tpu.memory_space<vmem>>, vector<8x256xbf16>,
    %c8_65 = arith.constant 8 : index
    %c129_66 = arith.constant 129 : index
    %87 = vector.load %arg4[%c8_65, %c129_66] : memref<16x401xbf16, #tpu.memory_space<vmem>>, vector<8x256xbf16>
    %88 = arith.select %48, %87, %49 : vector<8x256xi1>, vector<8x256xbf16>
    %c40_67 = arith.constant 40 : index
    %c256_68 = arith.constant 256 : index
    %89 = vector.load %arg5[%c40_67, %c256_68] : memref<72x512xbf16, #tpu.memory_space<vmem>>, vector<8x256xbf16>
    tpu.vector_store %arg5[%c40_67, %c256_68], %88 {strides = array<i32>} : memref<72x512xbf16, #tpu.memory_space<vmem>>, vector<8x256xbf16>,
    %c8_69 = arith.constant 8 : index
    %c143_70 = arith.constant 143 : index
    %90 = vector.load %arg4[%c8_69, %c143_70] : memref<16x401xbf16, #tpu.memory_space<vmem>>, vector<8x256xbf16>
    %91 = arith.select %39, %90, %49 : vector<8x256xi1>, vector<8x256xbf16>
    %c48_71 = arith.constant 48 : index
    %c256_72 = arith.constant 256 : index
    %92 = vector.load %arg5[%c48_71, %c256_72] : memref<72x512xbf16, #tpu.memory_space<vmem>>, vector<8x256xbf16>
    tpu.vector_store %arg5[%c48_71, %c256_72], %91 {strides = array<i32>} : memref<72x512xbf16, #tpu.memory_space<vmem>>, vector<8x256xbf16>,
    %c8_73 = arith.constant 8 : index
    %c144_74 = arith.constant 144 : index
    %93 = vector.load %arg4[%c8_73, %c144_74] : memref<16x401xbf16, #tpu.memory_space<vmem>>, vector<8x256xbf16>
    %c56_75 = arith.constant 56 : index
    %c256_76 = arith.constant 256 : index
    %94 = vector.load %arg5[%c56_75, %c256_76] : memref<72x512xbf16, #tpu.memory_space<vmem>>, vector<8x256xbf16>
    tpu.vector_store %arg5[%c56_75, %c256_76], %93 {strides = array<i32>} : memref<72x512xbf16, #tpu.memory_space<vmem>>, vector<8x256xbf16>,
    %c8_77 = arith.constant 8 : index
    %c145_78 = arith.constant 145 : index
    %95 = vector.load %arg4[%c8_77, %c145_78] : memref<16x401xbf16, #tpu.memory_space<vmem>>, vector<8x256xbf16>
    %96 = arith.select %48, %95, %49 : vector<8x256xi1>, vector<8x256xbf16>
    %c64_79 = arith.constant 64 : index
    %c256_80 = arith.constant 256 : index
    %97 = vector.load %arg5[%c64_79, %c256_80] : memref<72x512xbf16, #tpu.memory_space<vmem>>, vector<8x256xbf16>
    tpu.vector_store %arg5[%c64_79, %c256_80], %96 {strides = array<i32>} : memref<72x512xbf16, #tpu.memory_space<vmem>>, vector<8x256xbf16>,
    %c0_81 = arith.constant 0 : index
    %c0_82 = arith.constant 0 : index
    %98 = vector.load %arg2[%c0_81, %c0_82] : memref<16x72xbf16, #tpu.memory_space<vmem>>, vector<16x72xbf16>
    %c0_83 = arith.constant 0 : index
    %c0_84 = arith.constant 0 : index
    %99 = vector.load %arg5[%c0_83, %c0_84] : memref<72x512xbf16, #tpu.memory_space<vmem>>, vector<72x512xbf16>
    %cst_85 = arith.constant dense<0.000000e+00> : vector<16x512xf32>
    %100 = tpu.matmul %98, %99, %cst_85 {dimension_numbers = #tpu.dot_dimension_numbers<[1], [0], [0], [1], [0, 0, 1, 1], [], []>} : vector<16x72xbf16>, vector<72x512xbf16>, vector<16x512xf32> -> vector<16x512xf32>
    %101 = vector.extract_strided_slice %100 {offsets = [0, 0], sizes = [16, 256], strides = [1, 1]} : vector<16x512xf32> to vector<16x256xf32>
    %c0_86 = arith.constant 0 : index
    %c0_87 = arith.constant 0 : index
    %c0_88 = arith.constant 0 : index
    %102 = vector.load %arg3[%c0_86, %c0_87, %c0_88] : memref<2x16x256xf32, #tpu.memory_space<vmem>>, vector<1x16x256xf32>
    %103 = vector.shape_cast %102 : vector<1x16x256xf32> to vector<16x256xf32>
    %104 = vector.shape_cast %101 : vector<16x256xf32> to vector<1x16x256xf32>
    tpu.vector_store %arg3[%c0_86, %c0_87, %c0_88], %104 {strides = array<i32>} : memref<2x16x256xf32, #tpu.memory_space<vmem>>, vector<1x16x256xf32>,
    %105 = vector.extract_strided_slice %100 {offsets = [0, 256], sizes = [16, 256], strides = [1, 1]} : vector<16x512xf32> to vector<16x256xf32>
    %c1_89 = arith.constant 1 : index
    %c0_90 = arith.constant 0 : index
    %c0_91 = arith.constant 0 : index
    %106 = vector.load %arg3[%c1_89, %c0_90, %c0_91] : memref<2x16x256xf32, #tpu.memory_space<vmem>>, vector<1x16x256xf32>
    %107 = vector.shape_cast %106 : vector<1x16x256xf32> to vector<16x256xf32>
    %108 = vector.shape_cast %105 : vector<16x256xf32> to vector<1x16x256xf32>
    tpu.vector_store %arg3[%c1_89, %c0_90, %c0_91], %108 {strides = array<i32>} : memref<2x16x256xf32, #tpu.memory_space<vmem>>, vector<1x16x256xf32>,
    return
  }
  func.func @transform_0(%arg0: i32) -> (i32, i32, i32) {
    %c0_i32 = arith.constant 0 : i32
    %c0_i32_0 = arith.constant 0 : i32
    %c0_i32_1 = arith.constant 0 : i32
    return %arg0, %c0_i32, %c0_i32_0 : i32, i32, i32
  }
  func.func @transform_1(%arg0: i32) -> (i32, i32) {
    %c0_i32 = arith.constant 0 : i32
    %c0_i32_0 = arith.constant 0 : i32
    %c0_i32_1 = arith.constant 0 : i32
    return %c0_i32, %c0_i32_0 : i32, i32
  }
  func.func @transform_2(%arg0: i32) -> (i32, i32, i32) {
    %c0_i32 = arith.constant 0 : i32
    %c0_i32_0 = arith.constant 0 : i32
    %c0_i32_1 = arith.constant 0 : i32
    return %arg0, %c0_i32, %c0_i32_0 : i32, i32, i32
  }
}

</mosaic_0001>

<llo_original>
// kernel: deconvs_forward.1
$region0: #{deconvs_forward.1}
  #allocation0 [shape = 'u32[]', space=smem, size = 0x4, offset = 0x4, fixed_abs, tag = 'smem constant byte address 0x4 - core index']
  #allocation1 [shape = 'u32[144,128]{1,0:T(1,128)}', space=vmem, size = 0x12000, scoped, tag = 'internal scratch']
  #allocation2 [shape = 'bf16[16,401]{1,0:T(8,128)(2,1)}', space=vmem, size = 0x4000, scoped, tag = 'scratch operand']
  #allocation3 [shape = 'bf16[72,512]{1,0:T(8,128)(2,1)}', space=vmem, size = 0x12000, scoped, tag = 'scratch operand']
  %s0 = inlined_call_operand.vmem [shape: bf16[2,4,256], index: 0, kind: input, shape index: {}]
  %s1 = inlined_call_operand.vmem [shape: bf16[16,72], index: 1, kind: input, shape index: {}]
  %s2 = inlined_call_operand.vmem [shape: f32[2,16,256], index: 2, kind: output, shape index: {}]
  %s3 = sld [smem:[#allocation0]]
  $region18: #{deconvs_forward.1} parent=0
    _
  %s5 = ssub.s32 1, %s3
  %s6 = scalar_select 0, %s5, %s3
  // Predicated region
  $region2: #{deconvs_forward.1} parent=0 // pred_check
    _
  $region3: #{deconvs_forward.1} parent=0 // pred_check_branch
    %8 = sbr.rel (0) target = $region5
  $region4: #{deconvs_forward.1} parent=0 // pred_region
    _
  $region5: #{deconvs_forward.1} parent=0 // pred_fallthru
    _
  // Predicated region
  $region6: #{deconvs_forward.1} parent=0 // pred_check
    _
  $region7: #{deconvs_forward.1} parent=0 // pred_check_branch
    %10 = sbr.rel (0) target = $region9
  $region8: #{deconvs_forward.1} parent=0 // pred_region
    _
  $region9: #{deconvs_forward.1} parent=0 // pred_fallthru
    _
  %14 = vst [vmem:[#allocation2] sm:$0xf] 0
  %15 = vst [vmem:[#allocation2 + $0x10] sm:$0xf] 0
  %vm16 = vcmask 134144
  %17 = vst.msk [vmem:[#allocation2 + $0xc] sm:$0xf] %vm16, 0
  %18 = vst.msk [vmem:[#allocation2 + $0x1c] sm:$0xf] %vm16, 0
  %v19 = vld [vmem:[%s0] sm:$0xf]
  %v22 = vunpack.c.l.s4 1983009808
  %v23 = vunpack.c.0.s8 %v22
  %v24 = vlaneseq
  %v25 = vshrl.u32 %v24, 7
  %v26 = vsub.s32 %v23, %v25
  %v27 = vrot.slane %v19, %v26
  %29 = vst [vmem:[#allocation2 + $0x4] sm:$0x33] %v27
  %30 = vst [vmem:[#allocation2 + $0x4] sm:$0xcc] 0
  %s31 = scalar_lea.vmem %s0, 4
  %v32 = vld [vmem:[%s31] sm:$0xf]
  %v35 = vunpack.c.l.s4 1983009808
  %v36 = vunpack.c.0.s8 %v35
  %v37 = vlaneseq
  %v38 = vshrl.u32 %v37, 7
  %v39 = vsub.s32 %v36, %v38
  %v40 = vrot.slane %v32, %v39
  %42 = vst [vmem:[#allocation2 + $0x14] sm:$0x33] %v40
  %43 = vst [vmem:[#allocation2 + $0x14] sm:$0xcc] 0
  %v44 = vlaneseq
  %v45 = vand.u32 %v44, 127
  %v46 = vadd.s32 %v45, 128
  %vm47 = vcmp.lt.s32.totalorder %v45, 0
  %v48 = vsub.s32 0, %v45
  %v49 = vsel %vm47, %v48, %v45
  %v50 = vshrl.u32 %v49, 4
  %v51 = vand.u32 %v49, 15
  %v52 = vsub.s32 0, %v51
  %v53 = vsel %vm47, %v52, %v51
  %vm54 = vcmp.lt.s32.totalorder %v46, 0
  %v55 = vsub.s32 0, %v46
  %v56 = vsel %vm54, %v55, %v46
  %v57 = vshrl.u32 %v56, 4
  %v58 = vand.u32 %v56, 15
  %v59 = vsub.s32 0, %v58
  %v60 = vsel %vm54, %v59, %v58
  %vm61 = vcmp.ne.s32.totalorder %v53, 0
  %vm62 = vcmp.ne.s32.totalorder %v60, 0
  %vm63 = vcmp.lt.s32.totalorder %v53, 0
  %vm64 = vcmp.lt.s32.totalorder %v60, 0
  %vm65 = vmand %vm63, %vm61
  %vm66 = vmand %vm64, %vm62
  %v67 = vadd.s32 %v53, 16
  %v68 = vadd.s32 %v60, 16
  %v69 = vsel %vm65, %v67, %v53
  %v70 = vsel %vm66, %v68, %v60
  %v71 = vadd.s32 %v69, 4294967295
  %v72 = vadd.s32 %v70, 4294967295
  %vm73 = vcmp.ge.s32.totalorder %v71, 0
  %vm74 = vcmp.ge.s32.totalorder %v72, 0
  %vm75 = vcmp.lt.s32.totalorder %v71, 16
  %vm76 = vcmp.lt.s32.totalorder %v72, 16
  %vm77 = vmand %vm73, %vm75
  %vm78 = vmand %vm74, %vm76
  %v79 = vadd.s32 %v69, 1
  %v80 = vadd.s32 %v70, 1
  %vm81 = vcmp.ge.s32.totalorder %v79, 0
  %vm82 = vcmp.ge.s32.totalorder %v80, 0
  %vm83 = vcmp.lt.s32.totalorder %v79, 16
  %vm84 = vcmp.lt.s32.totalorder %v80, 16
  %vm85 = vmand %vm81, %vm83
  %vm86 = vmand %vm82, %vm84
  %v87 = vld [vmem:[#allocation2] sm:$0xff]
  %v88 = vld [vmem:[#allocation2 + $0x8] sm:$0xf]
  %vm89 = vmpackc.low %vm78, %vm77
  %v90 = vsel %vm89, 65537, 0
  %91 = vrot.lane.b32.xlu0 %v90, 111
  %v92 = vpop.permute.xlu0 %91
  %v93 = vrot.slane %v92, 4
  %vm94 = vcmask 908288
  %v95 = vsel %vm94, %v93, %v92
  %vm96 = vcmp.ne.s16.totalorder %v95, 0
  %vm97 = vcmp.ne.s16.totalorder %v93, 0
  %v98 = vsel %vm96, %v87, 0
  %v99 = vsel %vm97, %v88, 0
  %102 = vrot.lane.b32.xlu0 %v98, 17
  %v103 = vpop.permute.xlu0 %102
  %104 = vrot.lane.b32.xlu0 %v99, 17
  %v105 = vpop.permute.xlu0 %104
  %v106 = vrot.slane %v103, 4
  %v107 = vrot.slane %v105, 4
  %vm108 = vcmask 1043456
  %v109 = vsel %vm108, %v106, %v107
  %vm110 = vcmask 138240
  %v111 = vsel %vm110, %v103, %v109
  %113 = vst [vmem:[#allocation3] sm:$0xff] %v111
  %v114 = vld [vmem:[#allocation2] sm:$0xff]
  %v115 = vld [vmem:[#allocation2 + $0x8] sm:$0xf]
  %118 = vrot.lane.b32.xlu0 %v114, 16
  %v119 = vpop.permute.xlu0 %118
  %120 = vrot.lane.b32.xlu0 %v115, 16
  %v121 = vpop.permute.xlu0 %120
  %v122 = vrot.slane %v119, 4
  %v123 = vrot.slane %v121, 4
  %v124 = vsel %vm108, %v122, %v123
  %vm125 = vcmask 130048
  %v126 = vsel %vm125, %v119, %v124
  %128 = vst [vmem:[#allocation3 + $0x10] sm:$0xff] %v126
  %v129 = vld [vmem:[#allocation2] sm:$0xff]
  %v130 = vld [vmem:[#allocation2 + $0x8] sm:$0xf]
  %vm131 = vmpackc.low %vm86, %vm85
  %v132 = vsel %vm131, 65537, 0
  %133 = vrot.lane.b32.xlu0 %v132, 113
  %v134 = vpop.permute.xlu0 %133
  %v135 = vrot.slane %v134, 4
  %vm136 = vcmask 924672
  %v137 = vsel %vm136, %v135, %v134
  %vm138 = vcmp.ne.s16.totalorder %v137, 0
  %vm139 = vcmp.ne.s16.totalorder %v135, 0
  %v140 = vsel %vm138, %v129, 0
  %v141 = vsel %vm139, %v130, 0
  %144 = vrot.lane.b32.xlu0 %v140, 15
  %v145 = vpop.permute.xlu0 %144
  %146 = vrot.lane.b32.xlu0 %v141, 15
  %v147 = vpop.permute.xlu0 %146
  %v148 = vrot.slane %v145, 4
  %v149 = vrot.slane %v147, 4
  %v150 = vsel %vm108, %v148, %v149
  %vm151 = vcmask 121856
  %v152 = vsel %vm151, %v145, %v150
  %154 = vst [vmem:[#allocation3 + $0x20] sm:$0xff] %v152
  %v155 = vld [vmem:[#allocation2] sm:$0xff]
  %v156 = vld [vmem:[#allocation2 + $0x8] sm:$0xf]
  %157 = vrot.lane.b32.xlu0 %v90, 127
  %v158 = vpop.permute.xlu0 %157
  %v159 = vrot.slane %v158, 4
  %vm160 = vcmask 1039360
  %v161 = vsel %vm160, %v159, %v158
  %vm162 = vcmp.ne.s16.totalorder %v161, 0
  %vm163 = vcmp.ne.s16.totalorder %v159, 0
  %v164 = vsel %vm162, %v155, 0
  %v165 = vsel %vm163, %v156, 0
  %168 = vrot.lane.b32.xlu0 %v164, 1
  %v169 = vpop.permute.xlu0 %168
  %170 = vrot.lane.b32.xlu0 %v165, 1
  %v171 = vpop.permute.xlu0 %170
  %v172 = vrot.slane %v169, 4
  %v173 = vrot.slane %v171, 4
  %v174 = vsel %vm108, %v172, %v173
  %vm175 = vcmask 7168
  %v176 = vsel %vm175, %v169, %v174
  %178 = vst [vmem:[#allocation3 + $0x30] sm:$0xff] %v176
  %v179 = vld [vmem:[#allocation2 + $0x4] sm:$0xff]
  %180 = vst [vmem:[#allocation3 + $0x40] sm:$0xff] %v179
  %v181 = vld [vmem:[#allocation2 + $0x4] sm:$0xff]
  %v182 = vld [vmem:[#allocation2 + $0xc] sm:$0xf]
  %183 = vrot.lane.b32.xlu0 %v132, 1
  %v184 = vpop.permute.xlu0 %183
  %v185 = vrot.slane %v184, 4
  %v186 = vsel %vm175, %v185, %v184
  %vm187 = vcmp.ne.s16.totalorder %v186, 0
  %vm188 = vcmp.ne.s16.totalorder %v185, 0
  %v189 = vsel %vm187, %v181, 0
  %v190 = vsel %vm188, %v182, 0
  %193 = vrot.lane.b32.xlu0 %v189, 127
  %v194 = vpop.permute.xlu0 %193
  %195 = vrot.lane.b32.xlu0 %v190, 127
  %v196 = vpop.permute.xlu0 %195
  %v197 = vrot.slane %v194, 4
  %v198 = vrot.slane %v196, 4
  %v199 = vsel %vm108, %v197, %v198
  %v200 = vsel %vm160, %v194, %v199
  %202 = vst [vmem:[#allocation3 + $0x50] sm:$0xff] %v200
  %v203 = vld [vmem:[#allocation2 + $0x4] sm:$0xff]
  %v204 = vld [vmem:[#allocation2 + $0xc] sm:$0xf]
  %205 = vrot.lane.b32.xlu0 %v90, 15
  %v206 = vpop.permute.xlu0 %205
  %v207 = vrot.slane %v206, 4
  %v208 = vsel %vm151, %v207, %v206
  %vm209 = vcmp.ne.s16.totalorder %v208, 0
  %vm210 = vcmp.ne.s16.totalorder %v207, 0
  %v211 = vsel %vm209, %v203, 0
  %v212 = vsel %vm210, %v204, 0
  %215 = vrot.lane.b32.xlu0 %v211, 113
  %v216 = vpop.permute.xlu0 %215
  %217 = vrot.lane.b32.xlu0 %v212, 113
  %v218 = vpop.permute.xlu0 %217
  %v219 = vrot.slane %v216, 4
  %v220 = vrot.slane %v218, 4
  %v221 = vsel %vm108, %v219, %v220
  %v222 = vsel %vm136, %v216, %v221
  %224 = vst [vmem:[#allocation3 + $0x60] sm:$0xff] %v222
  %v225 = vld [vmem:[#allocation2 + $0x4] sm:$0xff]
  %v226 = vld [vmem:[#allocation2 + $0xc] sm:$0xf]
  %229 = vrot.lane.b32.xlu0 %v225, 112
  %v230 = vpop.permute.xlu0 %229
  %231 = vrot.lane.b32.xlu0 %v226, 112
  %v232 = vpop.permute.xlu0 %231
  %v233 = vrot.slane %v230, 4
  %v234 = vrot.slane %v232, 4
  %v235 = vsel %vm108, %v233, %v234
  %vm236 = vcmask 916480
  %v237 = vsel %vm236, %v230, %v235
  %239 = vst [vmem:[#allocation3 + $0x70] sm:$0xff] %v237
  %v240 = vld [vmem:[#allocation2 + $0x4] sm:$0xff]
  %v241 = vld [vmem:[#allocation2 + $0xc] sm:$0xf]
  %242 = vrot.lane.b32.xlu0 %v132, 17
  %v243 = vpop.permute.xlu0 %242
  %v244 = vrot.slane %v243, 4
  %v245 = vsel %vm110, %v244, %v243
  %vm246 = vcmp.ne.s16.totalorder %v245, 0
  %vm247 = vcmp.ne.s16.totalorder %v244, 0
  %v248 = vsel %vm246, %v240, 0
  %v249 = vsel %vm247, %v241, 0
  %252 = vrot.lane.b32.xlu0 %v248, 111
  %v253 = vpop.permute.xlu0 %252
  %254 = vrot.lane.b32.xlu0 %v249, 111
  %v255 = vpop.permute.xlu0 %254
  %v256 = vrot.slane %v253, 4
  %v257 = vrot.slane %v255, 4
  %v258 = vsel %vm108, %v256, %v257
  %v259 = vsel %vm94, %v253, %v258
  %261 = vst [vmem:[#allocation3 + $0x80] sm:$0xff] %v259
  %v262 = vld [vmem:[#allocation2 + $0x10] sm:$0xff]
  %v263 = vld [vmem:[#allocation2 + $0x18] sm:$0xf]
  %v264 = vsel %vm96, %v262, 0
  %v265 = vsel %vm97, %v263, 0
  %268 = vrot.lane.b32.xlu0 %v264, 17
  %v269 = vpop.permute.xlu0 %268
  %270 = vrot.lane.b32.xlu0 %v265, 17
  %v271 = vpop.permute.xlu0 %270
  %v272 = vrot.slane %v269, 4
  %v273 = vrot.slane %v271, 4
  %v274 = vsel %vm108, %v272, %v273
  %v275 = vsel %vm110, %v269, %v274
  %277 = vst [vmem:[#allocation3 + $0x8] sm:$0xff] %v275
  %v278 = vld [vmem:[#allocation2 + $0x10] sm:$0xff]
  %v279 = vld [vmem:[#allocation2 + $0x18] sm:$0xf]
  %282 = vrot.lane.b32.xlu0 %v278, 16
  %v283 = vpop.permute.xlu0 %282
  %284 = vrot.lane.b32.xlu0 %v279, 16
  %v285 = vpop.permute.xlu0 %284
  %v286 = vrot.slane %v283, 4
  %v287 = vrot.slane %v285, 4
  %v288 = vsel %vm108, %v286, %v287
  %v289 = vsel %vm125, %v283, %v288
  %291 = vst [vmem:[#allocation3 + $0x18] sm:$0xff] %v289
  %v292 = vld [vmem:[#allocation2 + $0x10] sm:$0xff]
  %v293 = vld [vmem:[#allocation2 + $0x18] sm:$0xf]
  %v294 = vsel %vm138, %v292, 0
  %v295 = vsel %vm139, %v293, 0
  %298 = vrot.lane.b32.xlu0 %v294, 15
  %v299 = vpop.permute.xlu0 %298
  %300 = vrot.lane.b32.xlu0 %v295, 15
  %v301 = vpop.permute.xlu0 %300
  %v302 = vrot.slane %v299, 4
  %v303 = vrot.slane %v301, 4
  %v304 = vsel %vm108, %v302, %v303
  %v305 = vsel %vm151, %v299, %v304
  %307 = vst [vmem:[#allocation3 + $0x28] sm:$0xff] %v305
  %v308 = vld [vmem:[#allocation2 + $0x10] sm:$0xff]
  %v309 = vld [vmem:[#allocation2 + $0x18] sm:$0xf]
  %v310 = vsel %vm162, %v308, 0
  %v311 = vsel %vm163, %v309, 0
  %314 = vrot.lane.b32.xlu0 %v310, 1
  %v315 = vpop.permute.xlu0 %314
  %316 = vrot.lane.b32.xlu0 %v311, 1
  %v317 = vpop.permute.xlu0 %316
  %v318 = vrot.slane %v315, 4
  %v319 = vrot.slane %v317, 4
  %v320 = vsel %vm108, %v318, %v319
  %v321 = vsel %vm175, %v315, %v320
  %323 = vst [vmem:[#allocation3 + $0x38] sm:$0xff] %v321
  %v324 = vld [vmem:[#allocation2 + $0x14] sm:$0xff]
  %325 = vst [vmem:[#allocation3 + $0x48] sm:$0xff] %v324
  %v326 = vld [vmem:[#allocation2 + $0x14] sm:$0xff]
  %v327 = vld [vmem:[#allocation2 + $0x1c] sm:$0xf]
  %v328 = vsel %vm187, %v326, 0
  %v329 = vsel %vm188, %v327, 0
  %332 = vrot.lane.b32.xlu0 %v328, 127
  %v333 = vpop.permute.xlu0 %332
  %334 = vrot.lane.b32.xlu0 %v329, 127
  %v335 = vpop.permute.xlu0 %334
  %v336 = vrot.slane %v333, 4
  %v337 = vrot.slane %v335, 4
  %v338 = vsel %vm108, %v336, %v337
  %v339 = vsel %vm160, %v333, %v338
  %341 = vst [vmem:[#allocation3 + $0x58] sm:$0xff] %v339
  %v342 = vld [vmem:[#allocation2 + $0x14] sm:$0xff]
  %v343 = vld [vmem:[#allocation2 + $0x1c] sm:$0xf]
  %v344 = vsel %vm209, %v342, 0
  %v345 = vsel %vm210, %v343, 0
  %348 = vrot.lane.b32.xlu0 %v344, 113
  %v349 = vpop.permute.xlu0 %348
  %350 = vrot.lane.b32.xlu0 %v345, 113
  %v351 = vpop.permute.xlu0 %350
  %v352 = vrot.slane %v349, 4
  %v353 = vrot.slane %v351, 4
  %v354 = vsel %vm108, %v352, %v353
  %v355 = vsel %vm136, %v349, %v354
  %357 = vst [vmem:[#allocation3 + $0x68] sm:$0xff] %v355
  %v358 = vld [vmem:[#allocation2 + $0x14] sm:$0xff]
  %v359 = vld [vmem:[#allocation2 + $0x1c] sm:$0xf]
  %362 = vrot.lane.b32.xlu0 %v358, 112
  %v363 = vpop.permute.xlu0 %362
  %364 = vrot.lane.b32.xlu0 %v359, 112
  %v365 = vpop.permute.xlu0 %364
  %v366 = vrot.slane %v363, 4
  %v367 = vrot.slane %v365, 4
  %v368 = vsel %vm108, %v366, %v367
  %v369 = vsel %vm236, %v363, %v368
  %371 = vst [vmem:[#allocation3 + $0x78] sm:$0xff] %v369
  %v372 = vld [vmem:[#allocation2 + $0x14] sm:$0xff]
  %v373 = vld [vmem:[#allocation2 + $0x1c] sm:$0xf]
  %v374 = vsel %vm246, %v372, 0
  %v375 = vsel %vm247, %v373, 0
  %378 = vrot.lane.b32.xlu0 %v374, 111
  %v379 = vpop.permute.xlu0 %378
  %380 = vrot.lane.b32.xlu0 %v375, 111
  %v381 = vpop.permute.xlu0 %380
  %v382 = vrot.slane %v379, 4
  %v383 = vrot.slane %v381, 4
  %v384 = vsel %vm108, %v382, %v383
  %v385 = vsel %vm94, %v379, %v384
  %387 = vst [vmem:[#allocation3 + $0x88] sm:$0xff] %v385
  %v388 = vld [vmem:[%s1] sm:$0xf]
  %v389 = vld [vmem:[%s1 + $0x4] sm:$0xf]
  %v390 = vld [vmem:[#allocation3] sm:$0xff]
  %v391 = vld [vmem:[#allocation3 + $0x8] sm:$0xff]
  %v392 = vld [vmem:[#allocation3 + $0x10] sm:$0xff]
  %v393 = vld [vmem:[#allocation3 + $0x18] sm:$0xff]
  %v394 = vld [vmem:[#allocation3 + $0x20] sm:$0xff]
  %v395 = vld [vmem:[#allocation3 + $0x28] sm:$0xff]
  %v396 = vld [vmem:[#allocation3 + $0x30] sm:$0xff]
  %v397 = vld [vmem:[#allocation3 + $0x38] sm:$0xff]
  %v398 = vld [vmem:[#allocation3 + $0x40] sm:$0xff]
  %v399 = vld [vmem:[#allocation3 + $0x48] sm:$0xff]
  %v400 = vld [vmem:[#allocation3 + $0x50] sm:$0xff]
  %v401 = vld [vmem:[#allocation3 + $0x58] sm:$0xff]
  %v402 = vld [vmem:[#allocation3 + $0x60] sm:$0xff]
  %v403 = vld [vmem:[#allocation3 + $0x68] sm:$0xff]
  %v404 = vld [vmem:[#allocation3 + $0x70] sm:$0xff]
  %v405 = vld [vmem:[#allocation3 + $0x78] sm:$0xff]
  %v406 = vld [vmem:[#allocation3 + $0x80] sm:$0xff]
  %v407 = vld [vmem:[#allocation3 + $0x88] sm:$0xff]
  %v410 = vunpack.c.l.b16 %v388
  %v411 = vunpack.c.l.b16 %v389
  %v412 = vpack.c.b16 %v411, %v410
  %v431 = vunpack.c.l.b16 %v390
  %v432 = vunpack.c.h.b16 %v390
  %v433 = vunpack.c.l.b16 %v391
  %v434 = vunpack.c.h.b16 %v391
  %v435 = vunpack.c.l.b16 %v392
  %v436 = vunpack.c.h.b16 %v392
  %v437 = vunpack.c.l.b16 %v393
  %v438 = vunpack.c.h.b16 %v393
  %v439 = vunpack.c.l.b16 %v394
  %v440 = vunpack.c.h.b16 %v394
  %v441 = vunpack.c.l.b16 %v395
  %v442 = vunpack.c.h.b16 %v395
  %v443 = vunpack.c.l.b16 %v396
  %v444 = vunpack.c.h.b16 %v396
  %v445 = vunpack.c.l.b16 %v397
  %v446 = vunpack.c.h.b16 %v397
  %v447 = vunpack.c.l.b16 %v398
  %v448 = vunpack.c.h.b16 %v398
  %v449 = vunpack.c.l.b16 %v399
  %v450 = vunpack.c.h.b16 %v399
  %v451 = vunpack.c.l.b16 %v400
  %v452 = vunpack.c.h.b16 %v400
  %v453 = vunpack.c.l.b16 %v401
  %v454 = vunpack.c.h.b16 %v401
  %v455 = vunpack.c.l.b16 %v402
  %v456 = vunpack.c.h.b16 %v402
  %v457 = vunpack.c.l.b16 %v403
  %v458 = vunpack.c.h.b16 %v403
  %v459 = vunpack.c.l.b16 %v404
  %v460 = vunpack.c.h.b16 %v404
  %v461 = vunpack.c.l.b16 %v405
  %v462 = vunpack.c.h.b16 %v405
  %v463 = vunpack.c.l.b16 %v406
  %v464 = vunpack.c.h.b16 %v406
  %v465 = vunpack.c.l.b16 %v407
  %v466 = vunpack.c.h.b16 %v407
  %v467 = vpack.c.b16 %v435, %v431
  %v468 = vpack.c.b16 %v436, %v432
  %v469 = vpack.c.b16 %v437, %v433
  %v470 = vpack.c.b16 %v438, %v434
  %v471 = vpack.c.b16 %v443, %v439
  %v472 = vpack.c.b16 %v444, %v440
  %v473 = vpack.c.b16 %v445, %v441
  %v474 = vpack.c.b16 %v446, %v442
  %v475 = vpack.c.b16 %v451, %v447
  %v476 = vpack.c.b16 %v452, %v448
  %v477 = vpack.c.b16 %v453, %v449
  %v478 = vpack.c.b16 %v454, %v450
  %v479 = vpack.c.b16 %v459, %v455
  %v480 = vpack.c.b16 %v460, %v456
  %v481 = vpack.c.b16 %v461, %v457
  %v482 = vpack.c.b16 %v462, %v458
  %v483 = vpack.c.b16 %v463, %v463
  %v484 = vpack.c.b16 %v464, %v464
  %v485 = vpack.c.b16 %v465, %v465
  %v486 = vpack.c.b16 %v466, %v466
  %vm503 = vcmask 588800
  %v505 = vsel %vm503, %v412, 0
  %vm507 = vcmask 1043456
  %v509 = vsel %vm507, %v483, 0
  %v512 = vsel %vm507, %v484, 0
  %v515 = vsel %vm507, %v485, 0
  %v518 = vsel %vm507, %v486, 0
  %520 = vmatprep.subr.bf16.mxu0 0
  %521 = vmatpush1.bf16.msra.mxu0 0
  %522 = vmatprep.subr.bf16.mxu0 0
  %523 = vmatpush1.bf16.msra.mxu0 0
  %524 = vmatprep.subr.bf16.mxu0 0
  %525 = vmatpush1.bf16.msra.mxu0 0
  %526 = vmatprep.subr.bf16.mxu0 %v512
  %527 = vmatpush1.bf16.msra.mxu0 %v509
  %528 = vmatprep.subr.bf16.mxu0 %v480
  %529 = vmatpush1.bf16.msra.mxu0 %v479
  %530 = vmatprep.subr.bf16.mxu0 %v476
  %531 = vmatpush1.bf16.msra.mxu0 %v475
  %532 = vmatprep.subr.bf16.mxu0 %v472
  %533 = vmatpush1.bf16.msra.mxu0 %v471
  %534 = vmatprep.subr.bf16.mxu0 %v468
  %535 = vmatpush1.bf16.msra.mxu0 %v467
  %536 = vmatprep.subr.bf16.mxu0 0
  %537 = vmatpush2.bf16.msra.mxu0 0
  %538 = vmatprep.subr.bf16.mxu0 0
  %539 = vmatpush2.bf16.msra.mxu0 0
  %540 = vmatprep.subr.bf16.mxu0 0
  %541 = vmatpush2.bf16.msra.mxu0 0
  %542 = vmatprep.subr.bf16.mxu0 0
  %543 = vmatpush2.bf16.msra.mxu0 0
  %544 = vmatprep.subr.bf16.mxu0 0
  %545 = vmatpush2.bf16.msra.mxu0 0
  %546 = vmatprep.subr.bf16.mxu0 0
  %547 = vmatpush2.bf16.msra.mxu0 0
  %548 = vmatprep.subr.bf16.mxu0 0
  %549 = vmatpush2.bf16.msra.mxu0 0
  %550 = vmatprep.subr.bf16.mxu0 0
  %551 = vmatpush2.bf16.msra.mxu0 0
  %552 = vmatprep.mubr.bf16.mxu0 0
  %553 = vmatmul.mubr.bf16.gmra.mxu0 %v505
  %v554 = vpop.f32.mrf.mxu0
  %v555 = vadd.f32 0.0, %v554
  %v556 = vpop.f32.mrf.mxu0
  %v557 = vadd.f32 0.0, %v556
  %v558 = vpop.f32.mrf.mxu0
  %v559 = vadd.f32 0.0, %v558
  %v560 = vpop.f32.mrf.mxu0
  %v561 = vadd.f32 0.0, %v560
  %562 = vdwg.mxu0
  %563 = vmatprep.subr.bf16.mxu0 0
  %564 = vmatpush1.bf16.msra.mxu0 0
  %565 = vmatprep.subr.bf16.mxu0 0
  %566 = vmatpush1.bf16.msra.mxu0 0
  %567 = vmatprep.subr.bf16.mxu0 0
  %568 = vmatpush1.bf16.msra.mxu0 0
  %569 = vmatprep.subr.bf16.mxu0 %v518
  %570 = vmatpush1.bf16.msra.mxu0 %v515
  %571 = vmatprep.subr.bf16.mxu0 %v482
  %572 = vmatpush1.bf16.msra.mxu0 %v481
  %573 = vmatprep.subr.bf16.mxu0 %v478
  %574 = vmatpush1.bf16.msra.mxu0 %v477
  %575 = vmatprep.subr.bf16.mxu0 %v474
  %576 = vmatpush1.bf16.msra.mxu0 %v473
  %577 = vmatprep.subr.bf16.mxu0 %v470
  %578 = vmatpush1.bf16.msra.mxu0 %v469
  %579 = vmatprep.subr.bf16.mxu0 0
  %580 = vmatpush2.bf16.msra.mxu0 0
  %581 = vmatprep.subr.bf16.mxu0 0
  %582 = vmatpush2.bf16.msra.mxu0 0
  %583 = vmatprep.subr.bf16.mxu0 0
  %584 = vmatpush2.bf16.msra.mxu0 0
  %585 = vmatprep.subr.bf16.mxu0 0
  %586 = vmatpush2.bf16.msra.mxu0 0
  %587 = vmatprep.subr.bf16.mxu0 0
  %588 = vmatpush2.bf16.msra.mxu0 0
  %589 = vmatprep.subr.bf16.mxu0 0
  %590 = vmatpush2.bf16.msra.mxu0 0
  %591 = vmatprep.subr.bf16.mxu0 0
  %592 = vmatpush2.bf16.msra.mxu0 0
  %593 = vmatprep.subr.bf16.mxu0 0
  %594 = vmatpush2.bf16.msra.mxu0 0
  %595 = vmatprep.mubr.bf16.mxu0 0
  %596 = vmatmul.mubr.bf16.gmra.mxu0 %v505
  %v597 = vpop.f32.mrf.mxu0
  %v598 = vadd.f32 0.0, %v597
  %v599 = vpop.f32.mrf.mxu0
  %v600 = vadd.f32 0.0, %v599
  %v601 = vpop.f32.mrf.mxu0
  %v602 = vadd.f32 0.0, %v601
  %v603 = vpop.f32.mrf.mxu0
  %v604 = vadd.f32 0.0, %v603
  %605 = vdwg.mxu0
  %606 = vst [vmem:[%s2] sm:$0xff] %v555
  %607 = vst [vmem:[%s2 + $0x8] sm:$0xff] %v557
  %608 = vst [vmem:[%s2 + $0x10] sm:$0xff] %v559
  %609 = vst [vmem:[%s2 + $0x18] sm:$0xff] %v561
  %s610 = scalar_lea.vmem %s2, 32
  %611 = vst [vmem:[%s610] sm:$0xff] %v598
  %612 = vst [vmem:[%s610 + $0x8] sm:$0xff] %v600
  %613 = vst [vmem:[%s610 + $0x10] sm:$0xff] %v602
  %614 = vst [vmem:[%s610 + $0x18] sm:$0xff] %v604
  // Predicated region
  $region10: #{deconvs_forward.1} parent=0 // pred_check
    _
  $region11: #{deconvs_forward.1} parent=0 // pred_check_branch
    %616 = sbr.rel (0) target = $region13
  $region12: #{deconvs_forward.1} parent=0 // pred_region
    _
  $region13: #{deconvs_forward.1} parent=0 // pred_fallthru
    _
  // Predicated region
  $region14: #{deconvs_forward.1} parent=0 // pred_check
    _
  $region15: #{deconvs_forward.1} parent=0 // pred_check_branch
    %618 = sbr.rel (0) target = $region17
  $region16: #{deconvs_forward.1} parent=0 // pred_region
    _
  $region17: #{deconvs_forward.1} parent=0 // pred_fallthru
    _

</llo_original>
